<compile_context>
chip_gen: v5e
topology: v5e:2x2
jax: 0.10.0
libtpu: 0.0.40
codegen_flags: <defaults>
</compile_context>

<pallas_src>
import jax
import jax.numpy as jnp
from jax.experimental import pallas as pl
from jax.experimental.pallas import tpu as pltpu


def _nested_dropout_kernel(x_ref, chan_ref, thr_ref, o_ref):
    # x_ref/o_ref: VMEM (TB, TL) tile of the [B, C*spatial] view.
    # chan_ref:    VMEM (1, TL) int32 channel index per lane.
    # thr_ref:     VMEM (TB, 1) int32 per-batch keep threshold.
    keep = (chan_ref[...] <= thr_ref[...]).astype(x_ref.dtype)
    # Multiply (not where/select) so 0 * NaN -> NaN matches PyTorch `mask * x`.
    o_ref[...] = x_ref[...] * keep


def _vmem_budget():
    """Return (vmem_limit_bytes, per-block byte budget), generation-aware.

    Double-buffered in+out blocks cost ~4x the block bytes (+ tiny mask inputs),
    so the block budget is ~limit/6 for headroom.  v5e/v6e (128 MiB physical
    VMEM) -> 64 MiB scoped limit, ~10.7 MiB blocks; v7x (64 MiB VMEM) -> 40 MiB
    limit, ~6.7 MiB blocks.
    """
    default_cap = 64 * 1024 * 1024
    try:
        cap = int(getattr(pltpu.get_tpu_info(), "vmem_capacity_bytes", default_cap))
    except Exception:  # API drift / not on TPU at trace time: stay conservative
        cap = default_cap
    if cap < 32 * 1024 * 1024:
        cap = default_cap
    vmem_limit = min(64 * 1024 * 1024, (cap * 5) // 8)
    block_budget = vmem_limit // 6
    return vmem_limit, block_budget


def _choose_tiles(B, M, itemsize, budget, min_steps=4):
    """Pick (row_tile, lane_tile) for the [B, M] slab.

    Row tile is a sublane multiple (or the full batch dim); lane tile is a
    multiple of 128 (or the full lane dim) sized so one block is ~`budget`
    bytes.  If the resulting grid has only 2-3 steps it is re-split to >=4
    (even) steps so both v7x TensorCores get balanced work.
    """
    sub = {4: 8, 2: 16, 1: 32}.get(itemsize, 8)
    row_q = sub if B > sub else B  # minimal legal row count per block

    # Lane tile: full M if it fits the budget with the minimal row count, else
    # a multiple of 128 (partial last lane block is handled by masked stores).
    max_tl = max(128, (budget // max(row_q * itemsize, 1)) // 128 * 128)
    tl = M if M <= max_tl else max_tl

    # Row tile from the remaining budget.
    if B <= sub:
        tb = B  # full-dim exception
    else:
        tb = min(B, max(sub, (budget // max(tl * itemsize, 1)) // sub * sub))

    # Megacore balance (v7x: 2 TCs share the parallel grid): a 2- or 3-step grid
    # leaves one core with up to 50% more work; re-split to exactly 4 steps.
    cdiv = lambda a, b: -(-a // b)
    if 1 < cdiv(B, tb) * cdiv(M, tl) < min_steps:
        if M >= min_steps * 128:
            tl = max(128, (M // min_steps) // 128 * 128)
        elif B >= min_steps * sub:
            tb = max(sub, (B // min_steps) // sub * sub)
    return tb, tl


def nested_dropout_pallas(x, thresholds):
    """x: [B, C, *spatial]; thresholds: int[B] = geometric_sample + converged_unit."""
    orig_shape = x.shape
    B, C = int(orig_shape[0]), int(orig_shape[1])
    L = 1
    for d in orig_shape[2:]:
        L *= int(d)
    M = C * L
    itemsize = jnp.dtype(x.dtype).itemsize

    # Lane/sublane-dense slab: rows = batch, lanes = channel*spatial (free
    # row-major reshape).
    x_flat = x.reshape(B, M)
    thr = thresholds.astype(jnp.int32).reshape(B, 1)
    # Tiny per-lane channel index (O(C*spatial) int32); the keep mask is the
    # outer-product compare (chan <= thr) done in-kernel, so no full-size mask
    # is ever materialized in HBM.
    chan = (jnp.arange(M, dtype=jnp.int32) // jnp.int32(max(L, 1))).reshape(1, M)

    vmem_limit, block_budget = _vmem_budget()
    tb, tl = _choose_tiles(B, M, itemsize, block_budget)
    grid = (pl.cdiv(B, tb), pl.cdiv(M, tl))

    cost = pl.CostEstimate(
        flops=2 * B * M,  # compare + multiply per element
        transcendentals=0,
        bytes_accessed=2 * B * M * itemsize + M * 4 + B * 4,
    )

    out_flat = pl.pallas_call(
        _nested_dropout_kernel,
        out_shape=jax.ShapeDtypeStruct((B, M), x.dtype),
        grid=grid,
        in_specs=[
            pl.BlockSpec((tb, tl), lambda i, j: (i, j)),   # x slab
            pl.BlockSpec((1, tl), lambda i, j: (0, j)),    # channel index row
            pl.BlockSpec((tb, 1), lambda i, j: (i, 0)),    # per-batch threshold
        ],
        out_specs=pl.BlockSpec((tb, tl), lambda i, j: (i, j)),
        compiler_params=pltpu.CompilerParams(
            dimension_semantics=("parallel", "parallel"),
            vmem_limit_bytes=vmem_limit,
        ),
        cost_estimate=cost,
    )(x_flat, chan, thr)
    return out_flat.reshape(orig_shape)


def sample_geometric(key, shape, p):
    # Geometric(p): number of Bernoulli(p) failures before the first success,
    # support {0, 1, 2, ...}  (matches torch.distributions.Geometric).
    u = jax.random.uniform(key, shape, minval=1e-7, maxval=1.0)
    return jnp.floor(jnp.log(u) / jnp.log1p(-p)).astype(jnp.int32)


class NestedDropout:
    """JAX/Pallas port of the PyTorch NestedDropout forward hot path."""

    # TODO(synk): optimize_dropout / check_convergence / _old_repr caching and
    # freeze_gradients have no Pallas equivalent (host-side state + autograd
    # detach); only training-mode masking is implemented here.

    def __init__(self, p=0.1, converged_unit=0):
        self.p = p
        self._converged_unit = converged_unit
        self._has_converged = False
        print("Alert: Nested Dropout is being used")

    def has_converged(self):
        return self._has_converged

    def converged_unit(self):
        return self._converged_unit

    def __call__(self, x, key, training=True):
        if (not training) or self._has_converged:
            return x
        sample = sample_geometric(key, (x.shape[0],), self.p)
        thresholds = sample + jnp.int32(self._converged_unit)
        return nested_dropout_pallas(x, thresholds)


if __name__ == "__main__":
    key = jax.random.PRNGKey(0)
    k_x, k_drop = jax.random.split(key)

    def reference(x, thr):
        C = x.shape[1]
        mask = (jnp.arange(C, dtype=jnp.int32)[None, :] <= thr[:, None]).astype(x.dtype)
        mask = mask.reshape(mask.shape + (1,) * (x.ndim - 2))
        return mask * x

    # Case 1: module path, f32, lane-dense spatial (16x16 -> 256 lanes).
    B, C, H, W = 2, 4, 16, 16
    x = jax.random.normal(k_x, (B, C, H, W), dtype=jnp.float32)
    module = NestedDropout(p=0.1, converged_unit=0)
    y = jax.block_until_ready(module(x, k_drop, training=True))
    thr = sample_geometric(k_drop, (B,), 0.1) + jnp.int32(0)
    assert y.shape == x.shape and y.dtype == x.dtype
    assert jnp.allclose(y, reference(x, thr)), "f32 mismatch vs reference"

    # Case 2: bf16, spatial extent (64) < 128 but C*spatial (256) is lane-dense.
    x2 = jax.random.normal(k_x, (2, 4, 8, 8), dtype=jnp.bfloat16)
    thr2 = jnp.array([0, 2], dtype=jnp.int32)
    y2 = jax.block_until_ready(nested_dropout_pallas(x2, thr2))
    assert jnp.allclose(
        y2.astype(jnp.float32), reference(x2, thr2).astype(jnp.float32)
    ), "bf16 mismatch vs reference"

    # Case 3: odd lane-sparse shape exercising the full-dim block fallback.
    x3 = jax.random.normal(k_x, (2, 3, 5, 5), dtype=jnp.float32)
    thr3 = jnp.array([1, 0], dtype=jnp.int32)
    y3 = jax.block_until_ready(nested_dropout_pallas(x3, thr3))
    assert jnp.allclose(y3, reference(x3, thr3)), "odd-shape mismatch vs reference"

    # Eval / converged path is identity.
    y_eval = module(x, k_drop, training=False)
    assert y_eval is x

    print("KERNEL_OK")
</pallas_src>

<mosaic_0001>
module attributes {stable_mosaic.version = 11 : i64} {
  func.func @_nested_dropout_kernel(%arg0: i32, %arg1: i32, %arg2: memref<2x1024xf32, #tpu.memory_space<vmem>>, %arg3: memref<1x1024xi32, #tpu.memory_space<vmem>>, %arg4: memref<2x1xi32, #tpu.memory_space<vmem>>, %arg5: memref<2x1024xf32, #tpu.memory_space<vmem>>) attributes {dimension_semantics = [#tpu.dimension_semantics<parallel>, #tpu.dimension_semantics<parallel>], iteration_bounds = array<i64: 1, 1>, scalar_prefetch = 0 : i64, scratch_operands = 0 : i64, tpu.core_type = #tpu.core_type<tc>, window_params = [{transform_indices = @transform_0, window_bounds = array<i64: 2, 1024>}, {transform_indices = @transform_1, window_bounds = array<i64: 1, 1024>}, {transform_indices = @transform_2, window_bounds = array<i64: 2, 1>}, {transform_indices = @transform_3, window_bounds = array<i64: 2, 1024>}]} {
    %c0 = arith.constant 0 : index
    %c0_0 = arith.constant 0 : index
    %0 = vector.load %arg3[%c0, %c0_0] : memref<1x1024xi32, #tpu.memory_space<vmem>>, vector<1x1024xi32>
    %c0_1 = arith.constant 0 : index
    %c0_2 = arith.constant 0 : index
    %1 = vector.load %arg4[%c0_1, %c0_2] : memref<2x1xi32, #tpu.memory_space<vmem>>, vector<2x1xi32>
    %2 = vector.broadcast %0 : vector<1x1024xi32> to vector<2x1024xi32>
    %3 = vector.broadcast %1 : vector<2x1xi32> to vector<2x1024xi32>
    %4 = arith.cmpi sle, %2, %3 : vector<2x1024xi32>
    %5 = arith.extui %4 : vector<2x1024xi1> to vector<2x1024xi32>
    %6 = arith.sitofp %5 : vector<2x1024xi32> to vector<2x1024xf32>
    %c0_3 = arith.constant 0 : index
    %c0_4 = arith.constant 0 : index
    %7 = vector.load %arg2[%c0_3, %c0_4] : memref<2x1024xf32, #tpu.memory_space<vmem>>, vector<2x1024xf32>
    %8 = arith.mulf %7, %6 : vector<2x1024xf32>
    %c0_5 = arith.constant 0 : index
    %c0_6 = arith.constant 0 : index
    %9 = vector.load %arg5[%c0_5, %c0_6] : memref<2x1024xf32, #tpu.memory_space<vmem>>, vector<2x1024xf32>
    tpu.vector_store %arg5[%c0_5, %c0_6], %8 {strides = array<i32>} : memref<2x1024xf32, #tpu.memory_space<vmem>>, vector<2x1024xf32>,
    return
  }
  func.func @transform_0(%arg0: i32, %arg1: i32) -> (i32, i32) {
    %c0_i32 = arith.constant 0 : i32
    return %arg0, %arg1 : i32, i32
  }
  func.func @transform_1(%arg0: i32, %arg1: i32) -> (i32, i32) {
    %c0_i32 = arith.constant 0 : i32
    %c0_i32_0 = arith.constant 0 : i32
    return %c0_i32, %arg1 : i32, i32
  }
  func.func @transform_2(%arg0: i32, %arg1: i32) -> (i32, i32) {
    %c0_i32 = arith.constant 0 : i32
    %c0_i32_0 = arith.constant 0 : i32
    return %arg0, %c0_i32 : i32, i32
  }
  func.func @transform_3(%arg0: i32, %arg1: i32) -> (i32, i32) {
    %c0_i32 = arith.constant 0 : i32
    return %arg0, %arg1 : i32, i32
  }
}

</mosaic_0001>

<llo_original>
// kernel: tpu_custom_call.1
$region0: #{tpu_custom_call.1}
  #allocation0 [shape = 'u32[]', space=smem, size = 0x4, offset = 0x4, fixed_abs, tag = 'smem constant byte address 0x4 - core index']
  #allocation1 [shape = 'u32[72,128]{1,0:T(1,128)}', space=vmem, size = 0x9000, scoped, tag = 'internal scratch']
  %s0 = inlined_call_operand.hbm [shape: f32[2,1024], index: 0, kind: input, shape index: {}]
  %s1 = inlined_call_operand.hbm [shape: s32[1,1024], index: 1, kind: input, shape index: {}]
  %s2 = inlined_call_operand.vmem [shape: s32[2,1], index: 2, kind: input, shape index: {}]
  %s3 = inlined_call_operand.hbm [shape: f32[2,1024], index: 3, kind: output, shape index: {}]
  %s4 = sld [smem:[#allocation0]]
  $region30: #{tpu_custom_call.1} parent=0
    _
  %s6 = ssub.s32 1, %s4
  %s7 = scalar_select 0, %s6, %s4
  $region1: #{tpu_custom_call.1} parent=0
    #allocation2 [shape = 'u8[8192]{0}', space=vmem, size = 0x2000, scoped, tag = 'input window, operand 0, single buffered']
    #allocation3 [shape = 's32[1]{0}', space=sflag, size = 0x4, scoped, tag = 'scoped memory for tpu_custom_call.1']
    #allocation4 [shape = 's32[1]{0}', space=sflag, size = 0x4, scoped, tag = 'scoped memory for tpu_custom_call.1']
    #allocation5 [shape = 'u8[4096]{0}', space=vmem, size = 0x1000, scoped, tag = 'input window, operand 1, single buffered']
    #allocation6 [shape = 's32[1]{0}', space=sflag, size = 0x4, scoped, tag = 'scoped memory for tpu_custom_call.1']
    #allocation7 [shape = 'u8[8192]{0}', space=vmem, size = 0x2000, scoped, tag = 'output window, operand 0, single buffered']
    %8 = vsyncpa [#allocation3], 0
    %9 = vsyncpa [#allocation6], 0
    %10 = vsyncpa [#allocation4], 0
    // Predicated region
    $region2: #{tpu_custom_call.1} parent=1 // pred_check
      _
    $region3: #{tpu_custom_call.1} parent=1 // pred_check_branch
      %12 = sbr.rel (0) target = $region5
    $region4: #{tpu_custom_call.1} parent=1 // pred_region
      %14 = vsyncadd [#allocation3], 0
      %s16 = sshll.u32 %s0, 4
      %s17 = int_to_ptr.hbm [resolvable:$true] %s16
      %s18 = sshll.u32 [#allocation2], 4
      %s19 = int_to_ptr.vmem [resolvable:$true] %s18
      %21 = dma.hbm_to_vmem [thread:$0]  %s17, 256, %s19, [#allocation3]
    $region5: #{tpu_custom_call.1} parent=1 // pred_fallthru
      _
    // Predicated region
    $region6: #{tpu_custom_call.1} parent=1 // pred_check
      _
    $region7: #{tpu_custom_call.1} parent=1 // pred_check_branch
      %23 = sbr.rel (0) target = $region9
    $region8: #{tpu_custom_call.1} parent=1 // pred_region
      %25 = vsyncadd [#allocation6], 0
      %s27 = sshll.u32 %s1, 4
      %s28 = int_to_ptr.hbm [resolvable:$true] %s27
      %s29 = sshll.u32 [#allocation5], 4
      %s30 = int_to_ptr.vmem [resolvable:$true] %s29
      %32 = dma.hbm_to_vmem [thread:$0]  %s28, 128, %s30, [#allocation6]
    $region9: #{tpu_custom_call.1} parent=1 // pred_fallthru
      _
    // Predicated region
    $region10: #{tpu_custom_call.1} parent=1 // pred_check
      _
    $region11: #{tpu_custom_call.1} parent=1 // pred_check_branch
      %34 = sbr.rel (0) target = $region13
    $region12: #{tpu_custom_call.1} parent=1 // pred_region
      _
    $region13: #{tpu_custom_call.1} parent=1 // pred_fallthru
      _
    // Predicated region
    $region14: #{tpu_custom_call.1} parent=1 // pred_check
      _
    $region15: #{tpu_custom_call.1} parent=1 // pred_check_branch
      %36 = sbr.rel (0) target = $region17
    $region16: #{tpu_custom_call.1} parent=1 // pred_region
      %38 = dma.done [#allocation3], 256
    $region17: #{tpu_custom_call.1} parent=1 // pred_fallthru
      _
    // Predicated region
    $region18: #{tpu_custom_call.1} parent=1 // pred_check
      _
    $region19: #{tpu_custom_call.1} parent=1 // pred_check_branch
      %40 = sbr.rel (0) target = $region21
    $region20: #{tpu_custom_call.1} parent=1 // pred_region
      %42 = dma.done [#allocation6], 128
    $region21: #{tpu_custom_call.1} parent=1 // pred_fallthru
      _
    %v43 = vld [vmem:[#allocation5] sm:$0xff]
    %v44 = vld [vmem:[%s2] sm:$0x3]
    %v45 = vperm.slane %v43, 0
    %v46 = vperm.slane %v43, 1
    %v47 = vperm.slane %v43, 2
    %v48 = vperm.slane %v43, 3
    %v49 = vperm.slane %v43, 4
    %v50 = vperm.slane %v43, 5
    %v51 = vperm.slane %v43, 6
    %v52 = vperm.slane %v43, 7
    %53 = vset.pattern.permute.xlu0 0
    %54 = vperm.xlu0 %53, %v44
    %v55 = vpop.permute.xlu0 %54
    %vm56 = vcmp.le.s32.totalorder %v45, %v55
    %vm57 = vcmp.le.s32.totalorder %v46, %v55
    %vm58 = vcmp.le.s32.totalorder %v47, %v55
    %vm59 = vcmp.le.s32.totalorder %v48, %v55
    %vm60 = vcmp.le.s32.totalorder %v49, %v55
    %vm61 = vcmp.le.s32.totalorder %v50, %v55
    %vm62 = vcmp.le.s32.totalorder %v51, %v55
    %vm63 = vcmp.le.s32.totalorder %v52, %v55
    %v64 = vsel %vm56, 1, 0
    %v65 = vsel %vm57, 1, 0
    %v66 = vsel %vm58, 1, 0
    %v67 = vsel %vm59, 1, 0
    %v68 = vsel %vm60, 1, 0
    %v69 = vsel %vm61, 1, 0
    %v70 = vsel %vm62, 1, 0
    %v71 = vsel %vm63, 1, 0
    %v72 = vcvt.s32.f32 %v64
    %v73 = vcvt.s32.f32 %v65
    %v74 = vcvt.s32.f32 %v66
    %v75 = vcvt.s32.f32 %v67
    %v76 = vcvt.s32.f32 %v68
    %v77 = vcvt.s32.f32 %v69
    %v78 = vcvt.s32.f32 %v70
    %v79 = vcvt.s32.f32 %v71
    %v80 = vld [vmem:[#allocation2] sm:$0xff]
    %v81 = vld [vmem:[#allocation2 + $0x8] sm:$0xff]
    %v90 = vrot.slane %v73, 6
    %v91 = vrot.slane %v74, 4
    %v92 = vrot.slane %v75, 2
    %v93 = vrot.slane %v77, 6
    %v94 = vrot.slane %v78, 4
    %v95 = vrot.slane %v79, 2
    %vm96 = vcmask 1041408
    %v97 = vsel %vm96, %v72, %v90
    %vm98 = vcmask 1045508
    %v99 = vsel %vm98, %v91, %v92
    %vm100 = vcmask 1043456
    %v101 = vsel %vm100, %v97, %v99
    %v102 = vsel %vm96, %v76, %v93
    %v103 = vsel %vm98, %v94, %v95
    %v104 = vsel %vm100, %v102, %v103
    %v107 = vmul.f32 %v80, %v101
    %v108 = vmul.f32 %v81, %v104
    %109 = vst [vmem:[#allocation7] sm:$0xff] %v107
    %110 = vst [vmem:[#allocation7 + $0x8] sm:$0xff] %v108
    // Predicated region
    $region22: #{tpu_custom_call.1} parent=1 // pred_check
      _
    $region23: #{tpu_custom_call.1} parent=1 // pred_check_branch
      %112 = sbr.rel (0) target = $region25
    $region24: #{tpu_custom_call.1} parent=1 // pred_region
      %114 = vsyncadd [#allocation4], 0
      %s116 = sshll.u32 [#allocation7], 4
      %s117 = int_to_ptr.vmem [resolvable:$true] %s116
      %s118 = sshll.u32 %s3, 4
      %s119 = int_to_ptr.hbm [resolvable:$true] %s118
      %121 = dma.vmem_to_hbm [thread:$0]  %s117, 256, %s119, [#allocation4]
    $region25: #{tpu_custom_call.1} parent=1 // pred_fallthru
      _
    // Predicated region
    $region26: #{tpu_custom_call.1} parent=1 // pred_check
      _
    $region27: #{tpu_custom_call.1} parent=1 // pred_check_branch
      %123 = sbr.rel (0) target = $region29
    $region28: #{tpu_custom_call.1} parent=1 // pred_region
      %125 = dma.done [#allocation4], 256
    $region29: #{tpu_custom_call.1} parent=1 // pred_fallthru
      _
    %126 = vsyncpa [#allocation3], 1
    %127 = vsyncpa [#allocation6], 1
    %128 = vsyncpa [#allocation4], 1

</llo_original>
